<compile_context>
chip_gen: v7x
topology: tpu7x:2x2x1
jax: 0.10.0
libtpu: 0.0.40
codegen_flags: <defaults>
</compile_context>

<pallas_src>
import functools

import numpy as np
import jax
import jax.numpy as jnp
from jax.experimental import pallas as pl
from jax.experimental.pallas import tpu as pltpu


def ldam_loss_kernel(x_ref, tgt_ref, m_ref, out_ref, *, n_rows):
    pid = pl.program_id(0)

    x = x_ref[...].astype(jnp.float32)    # [T, C] native-dtype DMA, upcast in VMEM
    tgt = tgt_ref[...]                    # [T, 1] int32; -1 marks masked-out rows
    m = m_ref[...]                        # [1, C] f32 per-class margins

    t, c = x.shape
    col = jax.lax.broadcasted_iota(jnp.int32, (t, c), 1)
    is_tgt = col == tgt                   # [T, C] bool (<=1 true lane per row)

    # Margin only at the target column: torch.where(index, x - batch_m, x).
    out = jnp.where(is_tgt, x - m, x)

    # Per-row cross entropy (reduction='none'):
    #   CE_i = logsumexp(out_i) - out_i[target_i]
    row_max = jnp.max(out, axis=1, keepdims=True)
    lse = jnp.log(jnp.sum(jnp.exp(out - row_max), axis=1, keepdims=True)) + row_max
    tgt_logit = jnp.sum(jnp.where(is_tgt, out, 0.0), axis=1, keepdims=True)
    ce = lse - tgt_logit                  # [T, 1]

    # Row validity: inside the real batch AND selected by the mask (tgt >= 0).
    # Selects (not multiplies) so garbage/NaN from the ragged last tile's
    # out-of-bounds rows cannot leak into the sums.
    row = pid * t + jax.lax.broadcasted_iota(jnp.int32, (t, 1), 0)
    valid = (row < n_rows) & (tgt >= 0)
    num = jnp.sum(jnp.where(valid, ce, 0.0))      # scalar partial numerator
    den = jnp.sum(jnp.where(valid, 1.0, 0.0))     # scalar partial mask count

    # Per-tile partial output (lane 0 = num, lane 1 = den), reduced outside.
    lane = jax.lax.broadcasted_iota(jnp.int32, (1, 8, 128), 2)
    out_ref[...] = jnp.where(lane == 0, num, jnp.where(lane == 1, den, 0.0))


def make_m_list(cls_num_list, max_m):
    m_list = 1.0 / np.sqrt(np.sqrt(np.asarray(cls_num_list, dtype=np.float64)))
    m_list = m_list * (max_m / np.max(m_list))
    return jnp.asarray(m_list, dtype=jnp.float32)


def _round_up(v, mult):
    return ((v + mult - 1) // mult) * mult


def ldam_loss(x, target, mask, m_list, tile_n=None):
    """x: [N, C] f32/bf16 logits, target: [N] int, mask: [N] bool/float, m_list: [C] f32."""
    n, c = x.shape
    if x.dtype not in (jnp.float32, jnp.bfloat16, jnp.float16):
        x = x.astype(jnp.float32)         # no cast for f32/bf16 inputs: keep HBM traffic minimal
    m = jnp.asarray(m_list, jnp.float32).reshape(1, c)

    # Pack (target, mask) into one int32 column: -1 marks masked-out rows.
    tgt = jnp.where(
        jnp.asarray(mask).reshape(-1).astype(bool),
        jnp.asarray(target).reshape(-1).astype(jnp.int32),
        jnp.int32(-1),
    ).reshape(n, 1)

    # ---- batch tile: ~4 MiB of f32-equivalent logits per grid step ----
    if tile_n is None:
        bytes_per_row = c * 4 + 128 * 4   # f32 logits row + lane-padded target column (VMEM)
        tile_n = (4 * 1024 * 1024) // bytes_per_row
        tile_n = max(8, min(4096, (tile_n // 8) * 8))
    tile_n = int(tile_n)
    if tile_n < n:
        tile_n = max(8, (tile_n // 8) * 8)
    else:
        tile_n = n                        # single tile; block dim == full array dim (legal)
    num_tiles = -(-n // tile_n)

    # ---- VMEM budget sized from the tile (keeps one code path safe on v5e/v6e/v7x) ----
    x_item = jnp.dtype(x.dtype).itemsize
    x_tile = tile_n * c * x_item
    x_tile_f32 = tile_n * c * 4
    tgt_tile = tile_n * 128 * 4           # lane-padded int32 column in VMEM
    vmem_est = (2 * (x_tile + tgt_tile) + 6 * x_tile_f32
                + c * 4 + 2 * 8 * 128 * 4 + (1 << 20))
    vmem_limit = int(min(48 * 1024 * 1024, max(16 * 1024 * 1024, vmem_est)))

    cost = pl.CostEstimate(
        flops=int(6 * n * c),
        transcendentals=int(n * c),
        bytes_accessed=int(n * c * x_item + 4 * n + 4 * c + num_tiles * 8 * 128 * 4),
    )

    partials = pl.pallas_call(
        functools.partial(ldam_loss_kernel, n_rows=n),
        out_shape=jax.ShapeDtypeStruct((num_tiles, 8, 128), jnp.float32),
        grid=(num_tiles,),
        in_specs=[
            pl.BlockSpec((tile_n, c), lambda i: (i, 0)),   # logits tile (no padding, native dtype)
            pl.BlockSpec((tile_n, 1), lambda i: (i, 0)),   # packed target/mask column
            pl.BlockSpec((1, c), lambda i: (0, 0)),        # margins (resident)
        ],
        out_specs=pl.BlockSpec((1, 8, 128), lambda i: (i, 0, 0)),  # per-tile partials
        compiler_params=pltpu.CompilerParams(
            dimension_semantics=("parallel",),             # independent tiles -> megacore-friendly
            vmem_limit_bytes=vmem_limit,
        ),
        cost_estimate=cost,
    )(x, tgt, m)

    num_total = jnp.sum(partials[:, 0, 0])
    den_total = jnp.sum(partials[:, 0, 1])
    # TODO(synk): like the PyTorch reference, an all-False mask yields inf/nan.
    return num_total / den_total


def ldam_loss_ref(x, target, mask, m_list):
    """Pure-JAX reference of the PyTorch forward (weight=None)."""
    x = x.astype(jnp.float32)
    onehot = jax.nn.one_hot(target, x.shape[1], dtype=jnp.float32)
    out = x - onehot * m_list[None, :]
    lse = jax.scipy.special.logsumexp(out, axis=1)
    tgt_logit = jnp.take_along_axis(out, target[:, None], axis=1)[:, 0]
    ce = lse - tgt_logit
    m = mask.astype(jnp.float32)
    return jnp.sum(ce * m) / jnp.sum(m)


if __name__ == "__main__":
    key = jax.random.PRNGKey(0)
    N, C = 8, 32          # batch of 8 samples, 32 classes
    max_m = 0.5
    # synthetic class-frequency list (deterministic)
    cls_num_list = [100 + 17 * i for i in range(C)]
    m_list = make_m_list(cls_num_list, max_m)

    kx, kt = jax.random.split(key)
    x = jax.random.normal(kx, (N, C), dtype=jnp.float32)
    target = jax.random.randint(kt, (N,), 0, C, dtype=jnp.int32)
    # deterministic mask with at least one selected element (avoids div-by-zero)
    mask = jnp.array([1, 1, 0, 1, 0, 1, 1, 0], dtype=jnp.bool_)

    loss = jax.block_until_ready(ldam_loss(x, target, mask, m_list))
    ref = jax.block_until_ready(ldam_loss_ref(x, target, mask, m_list))
    if not jnp.allclose(loss, ref, rtol=1e-5, atol=1e-5):
        raise AssertionError(f"mismatch: kernel={loss} ref={ref}")
    print("KERNEL_OK")
</pallas_src>

<mosaic_0001>
module attributes {stable_mosaic.version = 11 : i64} {
  func.func @ldam_loss_kernel(%arg0: i32, %arg1: memref<8x32xf32, #tpu.memory_space<vmem>>, %arg2: memref<8x1xi32, #tpu.memory_space<vmem>>, %arg3: memref<1x32xf32, #tpu.memory_space<vmem>>, %arg4: memref<1x8x128xf32, #tpu.memory_space<vmem>>) attributes {dimension_semantics = [#tpu.dimension_semantics<parallel>], iteration_bounds = array<i64: 1>, scalar_prefetch = 0 : i64, scratch_operands = 0 : i64, tpu.core_type = #tpu.core_type<tc>, window_params = [{transform_indices = @transform_0, window_bounds = array<i64: 8, 32>}, {transform_indices = @transform_1, window_bounds = array<i64: 8, 1>}, {pipeline_mode = #tpu.pipeline_mode<synchronous>, transform_indices = @transform_2, window_bounds = array<i64: 1, 32>}, {transform_indices = @transform_3, window_bounds = array<i64: 1, 8, 128>}]} {
    %c0 = arith.constant 0 : index
    %c0_0 = arith.constant 0 : index
    %0 = vector.load %arg1[%c0, %c0_0] : memref<8x32xf32, #tpu.memory_space<vmem>>, vector<8x32xf32>
    %c0_1 = arith.constant 0 : index
    %c0_2 = arith.constant 0 : index
    %1 = vector.load %arg2[%c0_1, %c0_2] : memref<8x1xi32, #tpu.memory_space<vmem>>, vector<8x1xi32>
    %c0_3 = arith.constant 0 : index
    %c0_4 = arith.constant 0 : index
    %2 = vector.load %arg3[%c0_3, %c0_4] : memref<1x32xf32, #tpu.memory_space<vmem>>, vector<1x32xf32>
    %3 = tpu.iota {dimensions = array<i32: 1>} : vector<8x32xi32>
    %4 = vector.broadcast %1 : vector<8x1xi32> to vector<8x32xi32>
    %5 = arith.cmpi eq, %3, %4 : vector<8x32xi32>
    %6 = vector.broadcast %2 : vector<1x32xf32> to vector<8x32xf32>
    %7 = arith.subf %0, %6 : vector<8x32xf32>
    %8 = arith.select %5, %7, %0 : vector<8x32xi1>, vector<8x32xf32>
    %cst = arith.constant dense<0xFF800000> : vector<8xf32>
    %9 = vector.multi_reduction <maximumf>, %8, %cst [1] : vector<8x32xf32> to vector<8xf32>
    %10 = vector.shape_cast %9 : vector<8xf32> to vector<8x1xf32>
    %11 = vector.broadcast %10 : vector<8x1xf32> to vector<8x32xf32>
    %12 = arith.subf %8, %11 : vector<8x32xf32>
    %13 = math.exp %12 : vector<8x32xf32>
    %cst_5 = arith.constant dense<0.000000e+00> : vector<8xf32>
    %14 = vector.multi_reduction <add>, %13, %cst_5 [1] : vector<8x32xf32> to vector<8xf32>
    %15 = vector.shape_cast %14 : vector<8xf32> to vector<8x1xf32>
    %16 = math.log %15 : vector<8x1xf32>
    %17 = arith.addf %16, %10 : vector<8x1xf32>
    %cst_6 = arith.constant 0.000000e+00 : f32
    %18 = vector.broadcast %cst_6 : f32 to vector<8x32xf32>
    %19 = arith.select %5, %8, %18 : vector<8x32xi1>, vector<8x32xf32>
    %cst_7 = arith.constant dense<0.000000e+00> : vector<8xf32>
    %20 = vector.multi_reduction <add>, %19, %cst_7 [1] : vector<8x32xf32> to vector<8xf32>
    %21 = vector.shape_cast %20 : vector<8xf32> to vector<8x1xf32>
    %22 = arith.subf %17, %21 : vector<8x1xf32>
    %c8_i32 = arith.constant 8 : i32
    %23 = arith.muli %arg0, %c8_i32 : i32
    %24 = tpu.iota {dimensions = array<i32: 0>} : vector<8x1xi32>
    %25 = vector.broadcast %23 : i32 to vector<8x1xi32>
    %26 = arith.addi %25, %24 : vector<8x1xi32>
    %c8_i32_8 = arith.constant 8 : i32
    %27 = vector.broadcast %c8_i32_8 : i32 to vector<8x1xi32>
    %28 = arith.cmpi slt, %26, %27 : vector<8x1xi32>
    %c0_i32 = arith.constant 0 : i32
    %29 = vector.broadcast %c0_i32 : i32 to vector<8x1xi32>
    %30 = arith.cmpi sge, %1, %29 : vector<8x1xi32>
    %31 = arith.andi %28, %30 : vector<8x1xi1>
    %cst_9 = arith.constant 0.000000e+00 : f32
    %32 = vector.broadcast %cst_9 : f32 to vector<8x1xf32>
    %33 = arith.select %31, %22, %32 : vector<8x1xi1>, vector<8x1xf32>
    %34 = vector.shape_cast %33 : vector<8x1xf32> to vector<1x8x1xf32>
    %cst_10 = arith.constant dense<0.000000e+00> : vector<1xf32>
    %35 = vector.multi_reduction <add>, %34, %cst_10 [1, 2] : vector<1x8x1xf32> to vector<1xf32>
    %36 = vector.shape_cast %35 : vector<1xf32> to vector<1x1x1xf32>
    %37 = vector.extract %36[0, 0, 0] : f32 from vector<1x1x1xf32>
    %cst_11 = arith.constant 1.000000e+00 : f32
    %cst_12 = arith.constant 0.000000e+00 : f32
    %38 = vector.broadcast %cst_11 : f32 to vector<8x1xf32>
    %39 = vector.broadcast %cst_12 : f32 to vector<8x1xf32>
    %40 = arith.select %31, %38, %39 : vector<8x1xi1>, vector<8x1xf32>
    %41 = vector.shape_cast %40 : vector<8x1xf32> to vector<1x8x1xf32>
    %cst_13 = arith.constant dense<0.000000e+00> : vector<1xf32>
    %42 = vector.multi_reduction <add>, %41, %cst_13 [1, 2] : vector<1x8x1xf32> to vector<1xf32>
    %43 = vector.shape_cast %42 : vector<1xf32> to vector<1x1x1xf32>
    %44 = vector.extract %43[0, 0, 0] : f32 from vector<1x1x1xf32>
    %45 = tpu.iota {dimensions = array<i32: 2>} : vector<1x8x128xi32>
    %c0_i32_14 = arith.constant 0 : i32
    %46 = vector.broadcast %c0_i32_14 : i32 to vector<1x8x128xi32>
    %47 = arith.cmpi eq, %45, %46 : vector<1x8x128xi32>
    %c1_i32 = arith.constant 1 : i32
    %48 = vector.broadcast %c1_i32 : i32 to vector<1x8x128xi32>
    %49 = arith.cmpi eq, %45, %48 : vector<1x8x128xi32>
    %cst_15 = arith.constant 0.000000e+00 : f32
    %50 = vector.broadcast %44 : f32 to vector<1x8x128xf32>
    %51 = vector.broadcast %cst_15 : f32 to vector<1x8x128xf32>
    %52 = arith.select %49, %50, %51 : vector<1x8x128xi1>, vector<1x8x128xf32>
    %53 = vector.broadcast %37 : f32 to vector<1x8x128xf32>
    %54 = arith.select %47, %53, %52 : vector<1x8x128xi1>, vector<1x8x128xf32>
    %c0_16 = arith.constant 0 : index
    %c0_17 = arith.constant 0 : index
    %c0_18 = arith.constant 0 : index
    %55 = vector.load %arg4[%c0_16, %c0_17, %c0_18] : memref<1x8x128xf32, #tpu.memory_space<vmem>>, vector<1x8x128xf32>
    tpu.vector_store %arg4[%c0_16, %c0_17, %c0_18], %54 {strides = array<i32>} : memref<1x8x128xf32, #tpu.memory_space<vmem>>, vector<1x8x128xf32>,
    return
  }
  func.func @transform_0(%arg0: i32) -> (i32, i32) {
    %c0_i32 = arith.constant 0 : i32
    %c0_i32_0 = arith.constant 0 : i32
    return %arg0, %c0_i32 : i32, i32
  }
  func.func @transform_1(%arg0: i32) -> (i32, i32) {
    %c0_i32 = arith.constant 0 : i32
    %c0_i32_0 = arith.constant 0 : i32
    return %arg0, %c0_i32 : i32, i32
  }
  func.func @transform_2(%arg0: i32) -> (i32, i32) {
    %c0_i32 = arith.constant 0 : i32
    %c0_i32_0 = arith.constant 0 : i32
    %c0_i32_1 = arith.constant 0 : i32
    return %c0_i32, %c0_i32_0 : i32, i32
  }
  func.func @transform_3(%arg0: i32) -> (i32, i32, i32) {
    %c0_i32 = arith.constant 0 : i32
    %c0_i32_0 = arith.constant 0 : i32
    %c0_i32_1 = arith.constant 0 : i32
    return %arg0, %c0_i32, %c0_i32_0 : i32, i32, i32
  }
}

</mosaic_0001>

<llo_original>
// kernel: tpu_custom_call.1
$region0: #{tpu_custom_call.1}
  #allocation0 [shape = 'u32[]', space=smem, size = 0x4, offset = 0x4, fixed_abs, tag = 'smem constant byte address 0x4 - core index']
  #allocation1 [shape = 'u32[144,128]{1,0:T(1,128)}', space=vmem, size = 0x12000, scoped, tag = 'internal scratch']
  %s0 = inlined_call_operand.vmem [shape: f32[8,32], index: 0, kind: input, shape index: {}]
  %s1 = inlined_call_operand.vmem [shape: s32[8,1], index: 1, kind: input, shape index: {}]
  %s2 = inlined_call_operand.vmem [shape: f32[1,32], index: 2, kind: input, shape index: {}]
  %s3 = inlined_call_operand.hbm [shape: f32[1,8,128], index: 3, kind: output, shape index: {}]
  %s4 = sld [smem:[#allocation0]]
  $region22: #{tpu_custom_call.1} parent=0
    _
  %s6 = ssub.s32 1, %s4
  %s7 = scalar_select 0, %s6, %s4
  $region1: #{tpu_custom_call.1} parent=0
    #allocation2 [shape = 'u8[4096]{0}', space=vmem, size = 0x1000, scoped, tag = 'output window, operand 0, single buffered']
    #allocation3 [shape = 's32[1]{0}', space=sflag, size = 0x4, scoped, tag = 'scoped memory for tpu_custom_call.1']
    %8 = vsyncpa [#allocation3], 0
    // Predicated region
    $region2: #{tpu_custom_call.1} parent=1 // pred_check
      _
    $region3: #{tpu_custom_call.1} parent=1 // pred_check_branch
      %10 = sbr.rel (0) target = $region5
    $region4: #{tpu_custom_call.1} parent=1 // pred_region
      _
    $region5: #{tpu_custom_call.1} parent=1 // pred_fallthru
      _
    // Predicated region
    $region6: #{tpu_custom_call.1} parent=1 // pred_check
      _
    $region7: #{tpu_custom_call.1} parent=1 // pred_check_branch
      %12 = sbr.rel (0) target = $region9
    $region8: #{tpu_custom_call.1} parent=1 // pred_region
      _
    $region9: #{tpu_custom_call.1} parent=1 // pred_fallthru
      _
    // Predicated region
    $region10: #{tpu_custom_call.1} parent=1 // pred_check
      _
    $region11: #{tpu_custom_call.1} parent=1 // pred_check_branch
      %14 = sbr.rel (0) target = $region13
    $region12: #{tpu_custom_call.1} parent=1 // pred_region
      _
    $region13: #{tpu_custom_call.1} parent=1 // pred_fallthru
      _
    %v15 = vld [vmem:[%s0] sm:$0xff]
    %v16 = vld [vmem:[%s1] sm:$0xff]
    %v17 = vld [vmem:[%s2] sm:$0x1]
    %v18 = vlaneseq
    %v19 = vand.u32 %v18, 127
    %20 = vset.pattern.permute.xlu0 0
    %21 = vperm.xlu0 %20, %v16
    %v22 = vpop.permute.xlu0 %21
    %vm23 = vcmp.eq.s32.totalorder %v19, %v22
    %v25 = vlaneseq
    %v26 = vshrl.u32 %v25, 7
    %v27 = vsub.s32 0, %v26
    %v28 = vrot.slane %v17, %v27
    %v30 = vsub.f32 %v15, %v28
    %v31 = vsel %vm23, %v30, %v15
    %vm32 = vcmask 261120
    %v33 = vsel %vm32, %v31, -inf
    %34 = vmax.xlane.f32.xlu0 %v33
    %v35 = vpop.xlane.xlu0 %34
    %v36 = vsub.f32 %v31, %v35
    %v37 = vmul.f32 %v36, 1.442695
    %v38 = vpow.pop %v37
    %v39 = vsel %vm32, %v38, 0.0
    %40 = vadd.xlane.f32.xlu0 %v39
    %v41 = vpop.xlane.xlu0 %40
    %v42 = vlog2.pop %v41
    %v43 = vmul.f32 %v42, 0.6931472
    %v44 = vadd.f32 %v43, %v35
    %v45 = vsel %vm23, %v30, 0.0
    %v46 = vsel %vm32, %v45, 0.0
    %47 = vadd.xlane.f32.xlu0 %v46
    %v48 = vpop.xlane.xlu0 %47
    %v49 = vsub.f32 %v44, %v48
    %s50 = smul.u32 0, 8
    %v51 = vlaneseq
    %v52 = vshrl.u32 %v51, 7
    %v53 = vstv %s50
    %v54 = vadd.s32 %v53, %v52
    %vm55 = vcmp.lt.s32.totalorder %v54, 8
    %vm56 = vcmp.ge.s32.totalorder %v16, 0
    %vm57 = vmand %vm55, %vm56
    %v58 = vsel %vm57, %v49, 0.0
    %vm59 = vcmask 7168
    %v60 = vsel %vm59, %v58, 0.0
    %61 = vadd.xlane.f32.xlu0 %v60
    %v62 = vpop.xlane.xlu0 %61
    %v63 = vrot.slane %v62, 4
    %v64 = vadd.f32 %v62, %v63
    %v65 = vrot.slane %v64, 2
    %v66 = vadd.f32 %v64, %v65
    %v67 = vrot.slane %v66, 1
    %v68 = vadd.f32 %v66, %v67
    %s69 = vtos %v68
    %v70 = vsel %vm57, 1.0, 0.0
    %v71 = vsel %vm59, %v70, 0.0
    %72 = vadd.xlane.f32.xlu0 %v71
    %v73 = vpop.xlane.xlu0 %72
    %v74 = vrot.slane %v73, 4
    %v75 = vadd.f32 %v73, %v74
    %v76 = vrot.slane %v75, 2
    %v77 = vadd.f32 %v75, %v76
    %v78 = vrot.slane %v77, 1
    %v79 = vadd.f32 %v77, %v78
    %s80 = vtos %v79
    %vm81 = vcmp.eq.s32.totalorder %v19, 0
    %vm82 = vcmp.eq.s32.totalorder %v19, 1
    %v83 = vstv %s80
    %v84 = vsel %vm82, %v83, 0.0
    %v85 = vstv %s69
    %v86 = vsel %vm81, %v85, %v84
    %87 = vst [vmem:[#allocation2] sm:$0xff] %v86
    // Predicated region
    $region14: #{tpu_custom_call.1} parent=1 // pred_check
      _
    $region15: #{tpu_custom_call.1} parent=1 // pred_check_branch
      %89 = sbr.rel (0) target = $region17
    $region16: #{tpu_custom_call.1} parent=1 // pred_region
      %s91 = ssub.s32 128, 128
      %92 = vsyncadd [#allocation3], %s91
      %s94 = sshll.u32 [#allocation2], 4
      %s95 = int_to_ptr.vmem [resolvable:$true] %s94
      %97 = dma.vmem_to_hbm [thread:$0]  %s95, 128, %s3, [#allocation3]
    $region17: #{tpu_custom_call.1} parent=1 // pred_fallthru
      _
    // Predicated region
    $region18: #{tpu_custom_call.1} parent=1 // pred_check
      _
    $region19: #{tpu_custom_call.1} parent=1 // pred_check_branch
      %99 = sbr.rel (0) target = $region21
    $region20: #{tpu_custom_call.1} parent=1 // pred_region
      %100 = dma.done [#allocation3], 128
    $region21: #{tpu_custom_call.1} parent=1 // pred_fallthru
      _
    %101 = vsyncpa [#allocation3], 1

</llo_original>
